<compile_context>
chip_gen: v7x
topology: tpu7x:2x2x1
jax: 0.10.0
libtpu: 0.0.40
codegen_flags: <defaults>
</compile_context>

<pallas_src>
import jax
import jax.numpy as jnp
from jax.experimental import pallas as pl
from jax.experimental.pallas import tpu as pltpu


def _make_ce_kl_kernel(n_actual: int, tile_n: int, tiles_per_slice: int, inv_n: float):
    """Kernel closure over the true batch size, row-tile size and per-slice tile count."""

    def kernel(logits_ref, target_ref, cent_ref, out_ref):
        p = pl.program_id(0)          # parallel slice (TensorCore) index
        j = pl.program_id(1)          # reduction step within the slice

        # Zero this slice's resident (1, 1, 2) accumulator on its first step.
        @pl.when(j == 0)
        def _():
            out_ref[...] = jnp.zeros_like(out_ref)

        t, c = logits_ref.shape
        x = logits_ref[...].astype(jnp.float32)                    # (T, C)

        # --- numerically stable softmax pieces; exp computed ONCE, no (T,C) p/logp ---
        m = jnp.max(x, axis=-1, keepdims=True)                     # (T, 1)
        shifted = x - m                                            # (T, C)
        e = jnp.exp(shifted)                                       # (T, C)  single EUP pass
        sum_e = jnp.sum(e, axis=-1, keepdims=True)                 # (T, 1)
        log_sum = jnp.log(sum_e)                                   # (T, 1)

        # shifted[i, target[i]] via a select feeding the row sum (no onehot materialized)
        col = jax.lax.broadcasted_iota(jnp.int32, (t, c), 1)
        tgt = target_ref[...]                                      # (T, 1) int32
        tgt_shifted = jnp.sum(jnp.where(col == tgt, shifted, 0.0),
                              axis=-1, keepdims=True)              # (T, 1)

        log_cent = jnp.log(cent_ref[...].astype(jnp.float32))      # (T, C)
        s_e_shift = jnp.sum(e * shifted, axis=-1, keepdims=True)   # (T, 1)
        s_e_lcent = jnp.sum(e * log_cent, axis=-1, keepdims=True)  # (T, 1)

        # Per-row losses (division only on (T,1) scalars — cheap and exact).
        ce_rows = log_sum - tgt_shifted                                    # (T, 1)
        kl_rows = (s_e_shift - s_e_lcent) / sum_e - log_sum                # (T, 1)

        # Mask rows past the true batch (ragged last tile / over-covered slice) with
        # SELECTS so garbage rows cannot inject NaN/Inf into the sums.
        tile_idx = p * tiles_per_slice + j
        row = tile_idx * tile_n + jax.lax.broadcasted_iota(jnp.int32, (t, 1), 0)
        valid = row < n_actual
        ce_part = jnp.sum(jnp.where(valid, ce_rows, 0.0))
        kl_part = jnp.sum(jnp.where(valid, kl_rows, 0.0))

        # Accumulate the two scalars into lanes {0, 1} of this slice's output block.
        lane = jax.lax.broadcasted_iota(jnp.int32, (1, 1, 2), 2)
        out_ref[...] += jnp.where(lane == 0, ce_part, kl_part)

        # Apply 1/N once, on this slice's last step.
        @pl.when(j == pl.num_programs(1) - 1)
        def _():
            out_ref[...] = out_ref[...] * inv_n

    return kernel


def ce_kl_loss(output, target, centroids, *, tile_n=None, num_parallel=None):
    """output: (N, C) logits; target: (N,) int labels; centroids: (N, C) class probs.

    Returns (loss, surrogate_loss) as f32 scalars, matching CE_KL_loss.forward.
    """
    n, c = output.shape
    assert centroids.shape == (n, c), (centroids.shape, (n, c))

    # --- VMEM budget per generation (v7x: 64 MiB/TC, v5e/v6e: 128 MiB) ---
    try:
        vmem_cap = int(pltpu.get_tpu_info().vmem_capacity_bytes)
    except Exception:  # no TPU info available: assume the smallest (v7x) VMEM
        vmem_cap = 64 * 1024 * 1024
    vmem_limit = int(min(vmem_cap * 3 // 4, 96 * 1024 * 1024))

    # --- row-tile sizing from a total-VMEM model (streams + f32 temporaries) ---
    out_bytes = output.dtype.itemsize
    cent_bytes = centroids.dtype.itemsize
    if tile_n is None:
        stream_row = 2 * (c * out_bytes + c * cent_bytes + 4)   # 2x double-buffered inputs
        temp_row = 4 * c * 4                                    # ~4 live f32 (T, C) temps
        budget = (vmem_limit * 3) // 5
        tile_n = budget // max(1, stream_row + temp_row)
        tile_n = int(max(16, min(4096, tile_n)))                # cap by bytes, not 512 rows
    tile_n = int(tile_n)
    if tile_n >= n:
        tile_n = n                                 # one full-extent row block (always legal)
    else:
        tile_n = max(8, (tile_n // 16) * 16)       # 16-row align (bf16 sublane packing)

    num_tiles = -(-n // tile_n)
    if num_parallel is None:
        num_parallel = 2 if num_tiles >= 2 else 1  # use both TCs on v7x; neutral elsewhere
    num_parallel = max(1, min(int(num_parallel), num_tiles))
    tiles_per_slice = -(-num_tiles // num_parallel)

    target2d = target.astype(jnp.int32).reshape(n, 1)

    kernel = _make_ce_kl_kernel(n_actual=n, tile_n=tile_n,
                                tiles_per_slice=tiles_per_slice,
                                inv_n=1.0 / float(n))

    def row_map(p, j):
        t = p * tiles_per_slice + j
        # Clamp: an over-covered slice re-reads the last tile; its rows are masked in-kernel.
        return (jnp.minimum(t, num_tiles - 1), 0)

    res = pl.pallas_call(
        kernel,
        out_shape=jax.ShapeDtypeStruct((num_parallel, 1, 2), jnp.float32),
        grid=(num_parallel, tiles_per_slice),
        in_specs=[
            pl.BlockSpec((tile_n, c), row_map),   # logits tile   (native dtype)
            pl.BlockSpec((tile_n, 1), row_map),   # target tile   (int32)
            pl.BlockSpec((tile_n, c), row_map),   # centroid tile (native dtype)
        ],
        # One VMEM-resident (1,1,2) accumulator block per parallel slice.
        out_specs=pl.BlockSpec((1, 1, 2), lambda p, j: (p, 0, 0)),
        compiler_params=pltpu.CompilerParams(
            dimension_semantics=("parallel", "arbitrary"),
            vmem_limit_bytes=vmem_limit,
        ),
    )(output, target2d, centroids)

    loss = jnp.sum(res[:, 0, 0])
    surrogate = jnp.sum(res[:, 0, 1])
    return loss, surrogate


def _reference(output, target, centroids):
    n = output.shape[0]
    logp = jax.nn.log_softmax(output, axis=1)
    p = jnp.exp(logp)
    ce = -jnp.mean(logp[jnp.arange(n), target])
    kl = jnp.sum(p * (logp - jnp.log(centroids))) / n
    return ce, kl


if __name__ == "__main__":
    key = jax.random.PRNGKey(0)
    k1, k2, k3 = jax.random.split(key, 3)

    # Small synthetic shapes consistent with the module: batch=8, n_classes=16.
    N, C = 8, 16
    output = jax.random.normal(k1, (N, C), dtype=jnp.float32)            # logits
    target = jax.random.randint(k2, (N,), 0, C, dtype=jnp.int32)         # labels
    centroids = jax.nn.softmax(jax.random.normal(k3, (N, C)), axis=1)    # class probs

    loss, surrogate = ce_kl_loss(output, target, centroids)
    loss, surrogate = jax.block_until_ready((loss, surrogate))

    ce_ref, kl_ref = _reference(output, target, centroids)
    assert jnp.allclose(loss, ce_ref, atol=1e-5, rtol=1e-4), (loss, ce_ref)
    assert jnp.allclose(surrogate, kl_ref, atol=1e-5, rtol=1e-4), (surrogate, kl_ref)

    # Second check: exercise the ragged last tile + two-slice parallel accumulators
    # (N not a multiple of tile_n, grid over-covers and the extra tile is masked).
    N2, C2 = 100, 64
    k4, k5, k6 = jax.random.split(jax.random.PRNGKey(1), 3)
    out2 = jax.random.normal(k4, (N2, C2), dtype=jnp.float32)
    tgt2 = jax.random.randint(k5, (N2,), 0, C2, dtype=jnp.int32)
    cen2 = jax.nn.softmax(jax.random.normal(k6, (N2, C2)), axis=1)

    l2, s2 = ce_kl_loss(out2, tgt2, cen2, tile_n=16, num_parallel=2)
    l2, s2 = jax.block_until_ready((l2, s2))
    ce2, kl2 = _reference(out2, tgt2, cen2)
    assert jnp.allclose(l2, ce2, atol=1e-5, rtol=1e-4), (l2, ce2)
    assert jnp.allclose(s2, kl2, atol=1e-5, rtol=1e-4), (s2, kl2)

    print("KERNEL_OK")
</pallas_src>

<mosaic_0001>
module attributes {stable_mosaic.version = 11 : i64} {
  func.func @kernel(%arg0: i32, %arg1: i32, %arg2: memref<8x16xf32, #tpu.memory_space<vmem>>, %arg3: memref<8x1xi32, #tpu.memory_space<vmem>>, %arg4: memref<8x16xf32, #tpu.memory_space<vmem>>, %arg5: memref<1x1x2xf32, #tpu.memory_space<vmem>>) attributes {dimension_semantics = [#tpu.dimension_semantics<parallel>, #tpu.dimension_semantics<arbitrary>], iteration_bounds = array<i64: 1, 1>, scalar_prefetch = 0 : i64, scratch_operands = 0 : i64, tpu.core_type = #tpu.core_type<tc>, window_params = [{transform_indices = @transform_0, window_bounds = array<i64: 8, 16>}, {transform_indices = @transform_1, window_bounds = array<i64: 8, 1>}, {transform_indices = @transform_2, window_bounds = array<i64: 8, 16>}, {transform_indices = @transform_3, window_bounds = array<i64: 1, 1, 2>}]} {
    %c0_i32 = arith.constant 0 : i32
    %0 = arith.cmpi eq, %arg1, %c0_i32 : i32
    %1 = arith.extui %0 : i1 to i32
    %c0_i32_0 = arith.constant 0 : i32
    %2 = arith.cmpi ne, %1, %c0_i32_0 : i32
    scf.if %2 {
      %cst_25 = arith.constant 0.000000e+00 : f32
      %64 = vector.broadcast %cst_25 : f32 to vector<1x1x2xf32>
      %c0_26 = arith.constant 0 : index
      %c0_27 = arith.constant 0 : index
      %c0_28 = arith.constant 0 : index
      %65 = vector.load %arg5[%c0_26, %c0_27, %c0_28] : memref<1x1x2xf32, #tpu.memory_space<vmem>>, vector<1x1x2xf32>
      tpu.vector_store %arg5[%c0_26, %c0_27, %c0_28], %64 {strides = array<i32>} : memref<1x1x2xf32, #tpu.memory_space<vmem>>, vector<1x1x2xf32>,
    } else {
    }
    %c0 = arith.constant 0 : index
    %c0_1 = arith.constant 0 : index
    %3 = vector.load %arg2[%c0, %c0_1] : memref<8x16xf32, #tpu.memory_space<vmem>>, vector<8x16xf32>
    %cst = arith.constant dense<0xFF800000> : vector<8xf32>
    %4 = vector.multi_reduction <maximumf>, %3, %cst [1] : vector<8x16xf32> to vector<8xf32>
    %5 = vector.shape_cast %4 : vector<8xf32> to vector<8x1xf32>
    %6 = vector.broadcast %5 : vector<8x1xf32> to vector<8x16xf32>
    %7 = arith.subf %3, %6 : vector<8x16xf32>
    %8 = math.exp %7 : vector<8x16xf32>
    %cst_2 = arith.constant dense<0.000000e+00> : vector<8xf32>
    %9 = vector.multi_reduction <add>, %8, %cst_2 [1] : vector<8x16xf32> to vector<8xf32>
    %10 = vector.shape_cast %9 : vector<8xf32> to vector<8x1xf32>
    %11 = math.log %10 : vector<8x1xf32>
    %12 = tpu.iota {dimensions = array<i32: 1>} : vector<8x16xi32>
    %c0_3 = arith.constant 0 : index
    %c0_4 = arith.constant 0 : index
    %13 = vector.load %arg3[%c0_3, %c0_4] : memref<8x1xi32, #tpu.memory_space<vmem>>, vector<8x1xi32>
    %14 = vector.broadcast %13 : vector<8x1xi32> to vector<8x16xi32>
    %15 = arith.cmpi eq, %12, %14 : vector<8x16xi32>
    %cst_5 = arith.constant 0.000000e+00 : f32
    %16 = vector.broadcast %cst_5 : f32 to vector<8x16xf32>
    %17 = arith.select %15, %7, %16 : vector<8x16xi1>, vector<8x16xf32>
    %cst_6 = arith.constant dense<0.000000e+00> : vector<8xf32>
    %18 = vector.multi_reduction <add>, %17, %cst_6 [1] : vector<8x16xf32> to vector<8xf32>
    %19 = vector.shape_cast %18 : vector<8xf32> to vector<8x1xf32>
    %c0_7 = arith.constant 0 : index
    %c0_8 = arith.constant 0 : index
    %20 = vector.load %arg4[%c0_7, %c0_8] : memref<8x16xf32, #tpu.memory_space<vmem>>, vector<8x16xf32>
    %21 = math.log %20 : vector<8x16xf32>
    %22 = arith.mulf %8, %7 : vector<8x16xf32>
    %cst_9 = arith.constant dense<0.000000e+00> : vector<8xf32>
    %23 = vector.multi_reduction <add>, %22, %cst_9 [1] : vector<8x16xf32> to vector<8xf32>
    %24 = vector.shape_cast %23 : vector<8xf32> to vector<8x1xf32>
    %25 = arith.mulf %8, %21 : vector<8x16xf32>
    %cst_10 = arith.constant dense<0.000000e+00> : vector<8xf32>
    %26 = vector.multi_reduction <add>, %25, %cst_10 [1] : vector<8x16xf32> to vector<8xf32>
    %27 = vector.shape_cast %26 : vector<8xf32> to vector<8x1xf32>
    %28 = arith.subf %11, %19 : vector<8x1xf32>
    %29 = arith.subf %24, %27 : vector<8x1xf32>
    %30 = arith.divf %29, %10 : vector<8x1xf32>
    %31 = arith.subf %30, %11 : vector<8x1xf32>
    %c1_i32 = arith.constant 1 : i32
    %32 = arith.muli %arg0, %c1_i32 : i32
    %33 = arith.addi %32, %arg1 : i32
    %c8_i32 = arith.constant 8 : i32
    %34 = arith.muli %33, %c8_i32 : i32
    %35 = tpu.iota {dimensions = array<i32: 0>} : vector<8x1xi32>
    %36 = vector.broadcast %34 : i32 to vector<8x1xi32>
    %37 = arith.addi %36, %35 : vector<8x1xi32>
    %c8_i32_11 = arith.constant 8 : i32
    %38 = vector.broadcast %c8_i32_11 : i32 to vector<8x1xi32>
    %39 = arith.cmpi slt, %37, %38 : vector<8x1xi32>
    %cst_12 = arith.constant 0.000000e+00 : f32
    %40 = vector.broadcast %cst_12 : f32 to vector<8x1xf32>
    %41 = arith.select %39, %28, %40 : vector<8x1xi1>, vector<8x1xf32>
    %42 = vector.shape_cast %41 : vector<8x1xf32> to vector<1x8x1xf32>
    %cst_13 = arith.constant dense<0.000000e+00> : vector<1xf32>
    %43 = vector.multi_reduction <add>, %42, %cst_13 [1, 2] : vector<1x8x1xf32> to vector<1xf32>
    %44 = vector.shape_cast %43 : vector<1xf32> to vector<1x1x1xf32>
    %45 = vector.extract %44[0, 0, 0] : f32 from vector<1x1x1xf32>
    %cst_14 = arith.constant 0.000000e+00 : f32
    %46 = vector.broadcast %cst_14 : f32 to vector<8x1xf32>
    %47 = arith.select %39, %31, %46 : vector<8x1xi1>, vector<8x1xf32>
    %48 = vector.shape_cast %47 : vector<8x1xf32> to vector<1x8x1xf32>
    %cst_15 = arith.constant dense<0.000000e+00> : vector<1xf32>
    %49 = vector.multi_reduction <add>, %48, %cst_15 [1, 2] : vector<1x8x1xf32> to vector<1xf32>
    %50 = vector.shape_cast %49 : vector<1xf32> to vector<1x1x1xf32>
    %51 = vector.extract %50[0, 0, 0] : f32 from vector<1x1x1xf32>
    %52 = tpu.iota {dimensions = array<i32: 2>} : vector<1x1x2xi32>
    %c0_16 = arith.constant 0 : index
    %c0_17 = arith.constant 0 : index
    %c0_18 = arith.constant 0 : index
    %53 = vector.load %arg5[%c0_16, %c0_17, %c0_18] : memref<1x1x2xf32, #tpu.memory_space<vmem>>, vector<1x1x2xf32>
    %c0_i32_19 = arith.constant 0 : i32
    %54 = vector.broadcast %c0_i32_19 : i32 to vector<1x1x2xi32>
    %55 = arith.cmpi eq, %52, %54 : vector<1x1x2xi32>
    %56 = vector.broadcast %45 : f32 to vector<1x1x2xf32>
    %57 = vector.broadcast %51 : f32 to vector<1x1x2xf32>
    %58 = arith.select %55, %56, %57 : vector<1x1x2xi1>, vector<1x1x2xf32>
    %59 = arith.addf %53, %58 : vector<1x1x2xf32>
    %c0_20 = arith.constant 0 : index
    %c0_21 = arith.constant 0 : index
    %c0_22 = arith.constant 0 : index
    %60 = vector.load %arg5[%c0_20, %c0_21, %c0_22] : memref<1x1x2xf32, #tpu.memory_space<vmem>>, vector<1x1x2xf32>
    tpu.vector_store %arg5[%c0_20, %c0_21, %c0_22], %59 {strides = array<i32>} : memref<1x1x2xf32, #tpu.memory_space<vmem>>, vector<1x1x2xf32>,
    %c0_i32_23 = arith.constant 0 : i32
    %61 = arith.cmpi eq, %arg1, %c0_i32_23 : i32
    %62 = arith.extui %61 : i1 to i32
    %c0_i32_24 = arith.constant 0 : i32
    %63 = arith.cmpi ne, %62, %c0_i32_24 : i32
    scf.if %63 {
      %c0_25 = arith.constant 0 : index
      %c0_26 = arith.constant 0 : index
      %c0_27 = arith.constant 0 : index
      %64 = vector.load %arg5[%c0_25, %c0_26, %c0_27] : memref<1x1x2xf32, #tpu.memory_space<vmem>>, vector<1x1x2xf32>
      %cst_28 = arith.constant 1.250000e-01 : f32
      %65 = vector.broadcast %cst_28 : f32 to vector<1x1x2xf32>
      %66 = arith.mulf %64, %65 : vector<1x1x2xf32>
      %c0_29 = arith.constant 0 : index
      %c0_30 = arith.constant 0 : index
      %c0_31 = arith.constant 0 : index
      %67 = vector.load %arg5[%c0_29, %c0_30, %c0_31] : memref<1x1x2xf32, #tpu.memory_space<vmem>>, vector<1x1x2xf32>
      tpu.vector_store %arg5[%c0_29, %c0_30, %c0_31], %66 {strides = array<i32>} : memref<1x1x2xf32, #tpu.memory_space<vmem>>, vector<1x1x2xf32>,
    } else {
    }
    return
  }
  func.func @transform_0(%arg0: i32, %arg1: i32) -> (i32, i32) {
    %c1_i32 = arith.constant 1 : i32
    %0 = arith.muli %arg0, %c1_i32 : i32
    %1 = arith.addi %0, %arg1 : i32
    %c0_i32 = arith.constant 0 : i32
    %2 = arith.minsi %1, %c0_i32 : i32
    %c0_i32_0 = arith.constant 0 : i32
    %c0_i32_1 = arith.constant 0 : i32
    return %2, %c0_i32_0 : i32, i32
  }
  func.func @transform_1(%arg0: i32, %arg1: i32) -> (i32, i32) {
    %c1_i32 = arith.constant 1 : i32
    %0 = arith.muli %arg0, %c1_i32 : i32
    %1 = arith.addi %0, %arg1 : i32
    %c0_i32 = arith.constant 0 : i32
    %2 = arith.minsi %1, %c0_i32 : i32
    %c0_i32_0 = arith.constant 0 : i32
    %c0_i32_1 = arith.constant 0 : i32
    return %2, %c0_i32_0 : i32, i32
  }
  func.func @transform_2(%arg0: i32, %arg1: i32) -> (i32, i32) {
    %c1_i32 = arith.constant 1 : i32
    %0 = arith.muli %arg0, %c1_i32 : i32
    %1 = arith.addi %0, %arg1 : i32
    %c0_i32 = arith.constant 0 : i32
    %2 = arith.minsi %1, %c0_i32 : i32
    %c0_i32_0 = arith.constant 0 : i32
    %c0_i32_1 = arith.constant 0 : i32
    return %2, %c0_i32_0 : i32, i32
  }
  func.func @transform_3(%arg0: i32, %arg1: i32) -> (i32, i32, i32) {
    %c0_i32 = arith.constant 0 : i32
    %c0_i32_0 = arith.constant 0 : i32
    %c0_i32_1 = arith.constant 0 : i32
    return %arg0, %c0_i32, %c0_i32_0 : i32, i32, i32
  }
}

</mosaic_0001>

<llo_original>
// kernel: tpu_custom_call.1
$region0: #{tpu_custom_call.1}
  #allocation0 [shape = 'u32[]', space=smem, size = 0x4, offset = 0x4, fixed_abs, tag = 'smem constant byte address 0x4 - core index']
  #allocation1 [shape = 'u32[144,128]{1,0:T(1,128)}', space=vmem, size = 0x12000, scoped, tag = 'internal scratch']
  %s0 = inlined_call_operand.vmem [shape: f32[8,16], index: 0, kind: input, shape index: {}]
  %s1 = inlined_call_operand.vmem [shape: s32[8,1], index: 1, kind: input, shape index: {}]
  %s2 = inlined_call_operand.vmem [shape: f32[8,16], index: 2, kind: input, shape index: {}]
  %s3 = inlined_call_operand.hbm [shape: f32[1,1,2], index: 3, kind: output, shape index: {}]
  %s4 = sld [smem:[#allocation0]]
  $region30: #{tpu_custom_call.1} parent=0
    _
  %s6 = ssub.s32 1, %s4
  %s7 = scalar_select 0, %s6, %s4
  $region1: #{tpu_custom_call.1} parent=0
    #allocation2 [shape = 'u8[512]{0}', space=vmem, size = 0x400, scoped, tag = 'output window, operand 0, single buffered']
    #allocation3 [shape = 's32[1]{0}', space=sflag, size = 0x4, scoped, tag = 'scoped memory for tpu_custom_call.1']
    %8 = vsyncpa [#allocation3], 0
    // Predicated region
    $region2: #{tpu_custom_call.1} parent=1 // pred_check
      _
    $region3: #{tpu_custom_call.1} parent=1 // pred_check_branch
      %10 = sbr.rel (0) target = $region5
    $region4: #{tpu_custom_call.1} parent=1 // pred_region
      %s11 = sadd.s32 0, 0
      %p12 = scmp.lt.s32.totalorder %s11, 0
      %s13 = scalar_select %p12, %s11, 0
      %p14 = scmp.lt.s32.totalorder %s13, 0
      %s15 = scalar_select %p14, %s13, 0
      %s16 = smul.addr %s15, 8
      %s17 = scalar_lea.vmem %s0, %s16
      %s18 = sadd.s32 0, 0
      %p19 = scmp.lt.s32.totalorder %s18, 0
      %s20 = scalar_select %p19, %s18, 0
    $region5: #{tpu_custom_call.1} parent=1 // pred_fallthru
      _
    // Predicated region
    $region6: #{tpu_custom_call.1} parent=1 // pred_check
      _
    $region7: #{tpu_custom_call.1} parent=1 // pred_check_branch
      %22 = sbr.rel (0) target = $region9
    $region8: #{tpu_custom_call.1} parent=1 // pred_region
      %s23 = sadd.s32 0, 0
      %p24 = scmp.lt.s32.totalorder %s23, 0
      %s25 = scalar_select %p24, %s23, 0
      %p26 = scmp.lt.s32.totalorder %s25, 0
      %s27 = scalar_select %p26, %s25, 0
      %s28 = smul.addr %s27, 8
      %s29 = scalar_lea.vmem %s1, %s28
      %s30 = sadd.s32 0, 0
      %p31 = scmp.lt.s32.totalorder %s30, 0
      %s32 = scalar_select %p31, %s30, 0
    $region9: #{tpu_custom_call.1} parent=1 // pred_fallthru
      _
    // Predicated region
    $region10: #{tpu_custom_call.1} parent=1 // pred_check
      _
    $region11: #{tpu_custom_call.1} parent=1 // pred_check_branch
      %34 = sbr.rel (0) target = $region13
    $region12: #{tpu_custom_call.1} parent=1 // pred_region
      %s35 = sadd.s32 0, 0
      %p36 = scmp.lt.s32.totalorder %s35, 0
      %s37 = scalar_select %p36, %s35, 0
      %p38 = scmp.lt.s32.totalorder %s37, 0
      %s39 = scalar_select %p38, %s37, 0
      %s40 = smul.addr %s39, 8
      %s41 = scalar_lea.vmem %s2, %s40
      %s42 = sadd.s32 0, 0
      %p43 = scmp.lt.s32.totalorder %s42, 0
      %s44 = scalar_select %p43, %s42, 0
    $region13: #{tpu_custom_call.1} parent=1 // pred_fallthru
      _
    %s45 = sadd.s32 0, 0
    %p46 = scmp.lt.s32.totalorder %s45, 0
    %s47 = scalar_select %p46, %s45, 0
    %p48 = scmp.lt.s32.totalorder %s47, 0
    %s49 = scalar_select %p48, %s47, 0
    %s50 = smul.addr %s49, 8
    %s51 = scalar_lea.vmem %s0, %s50
    %s52 = sadd.s32 0, 0
    %p53 = scmp.lt.s32.totalorder %s52, 0
    %s54 = scalar_select %p53, %s52, 0
    %p55 = scmp.lt.s32.totalorder %s54, 0
    %s56 = scalar_select %p55, %s54, 0
    %s57 = smul.addr %s56, 8
    %s58 = scalar_lea.vmem %s1, %s57
    %s59 = sadd.s32 0, 0
    %p60 = scmp.lt.s32.totalorder %s59, 0
    %s61 = scalar_select %p60, %s59, 0
    %p62 = scmp.lt.s32.totalorder %s61, 0
    %s63 = scalar_select %p62, %s61, 0
    %s64 = smul.addr %s63, 8
    %s65 = scalar_lea.vmem %s2, %s64
    %s66 = sadd.s32 0, 0
    %p67 = scmp.lt.s32.totalorder %s66, 0
    %s68 = scalar_select %p67, %s66, 0
    %p69 = scmp.lt.s32.totalorder %s68, 0
    %s70 = scalar_select %p69, %s68, 0
    %s71 = smul.addr %s70, 8
    %s72 = scalar_lea.vmem %s0, %s71
    %s73 = sadd.s32 0, 0
    %p74 = scmp.lt.s32.totalorder %s73, 0
    %s75 = scalar_select %p74, %s73, 0
    %s76 = sadd.s32 0, 0
    %p77 = scmp.lt.s32.totalorder %s76, 0
    %s78 = scalar_select %p77, %s76, 0
    %p79 = scmp.lt.s32.totalorder %s78, 0
    %s80 = scalar_select %p79, %s78, 0
    %s81 = smul.addr %s80, 8
    %s82 = scalar_lea.vmem %s1, %s81
    %s83 = sadd.s32 0, 0
    %p84 = scmp.lt.s32.totalorder %s83, 0
    %s85 = scalar_select %p84, %s83, 0
    %s86 = sadd.s32 0, 0
    %p87 = scmp.lt.s32.totalorder %s86, 0
    %s88 = scalar_select %p87, %s86, 0
    %p89 = scmp.lt.s32.totalorder %s88, 0
    %s90 = scalar_select %p89, %s88, 0
    %s91 = smul.addr %s90, 8
    %s92 = scalar_lea.vmem %s2, %s91
    %s93 = sadd.s32 0, 0
    %p94 = scmp.lt.s32.totalorder %s93, 0
    %s95 = scalar_select %p94, %s93, 0
    %p96 = scmp.eq.s32.totalorder 0, 0
    // Predicated region
    $region14: #{tpu_custom_call.1} parent=1 // pred_check
      %p97 = pneg %p96
    $region15: #{tpu_custom_call.1} parent=1 // pred_check_branch
      %99 = sbr.rel (%p97) target = $region17
    $region16: #{tpu_custom_call.1} parent=1 // pred_region
      %vm100 = vcmask 8192
      %101 = vst.msk [vmem:[#allocation2] sm:$0x1] %vm100, 0.0
    $region17: #{tpu_custom_call.1} parent=1 // pred_fallthru
      _
    %v102 = vld [vmem:[%s72] sm:$0xff]
    %vm103 = vcmask 130048
    %v104 = vsel %vm103, %v102, -inf
    %105 = vmax.xlane.f32.xlu0 %v104
    %v106 = vpop.xlane.xlu0 %105
    %v107 = vsub.f32 %v102, %v106
    %v108 = vmul.f32 %v107, 1.442695
    %v109 = vpow.pop %v108
    %v110 = vsel %vm103, %v109, 0.0
    %111 = vadd.xlane.f32.xlu0 %v110
    %v112 = vpop.xlane.xlu0 %111
    %v113 = vlog2.pop %v112
    %v114 = vmul.f32 %v113, 0.6931472
    %v115 = vlaneseq
    %v116 = vand.u32 %v115, 127
    %v117 = vld [vmem:[%s82] sm:$0xff]
    %118 = vset.pattern.permute.xlu0 0
    %119 = vperm.xlu0 %118, %v117
    %v120 = vpop.permute.xlu0 %119
    %vm121 = vcmp.eq.s32.totalorder %v116, %v120
    %v122 = vsel %vm121, %v107, 0.0
    %v123 = vsel %vm103, %v122, 0.0
    %124 = vadd.xlane.f32.xlu0 %v123
    %v125 = vpop.xlane.xlu0 %124
    %v126 = vld [vmem:[%s92] sm:$0xff]
    %v127 = vlog2.pop %v126
    %v128 = vmul.f32 %v127, 0.6931472
    %v129 = vmul.f32 %v109, %v107
    %v130 = vsel %vm103, %v129, 0.0
    %131 = vadd.xlane.f32.xlu0 %v130
    %v132 = vpop.xlane.xlu0 %131
    %v133 = vmul.f32 %v109, %v128
    %v134 = vsel %vm103, %v133, 0.0
    %135 = vadd.xlane.f32.xlu0 %v134
    %v136 = vpop.xlane.xlu0 %135
    %v137 = vsub.f32 %v114, %v125
    %v138 = vsub.f32 %v132, %v136
    %v139 = vrcp.pop %v112
    %v140 = vmul.f32 %v138, %v139
    %v141 = vsub.f32 %v140, %v114
    %s142 = sadd.s32 0, 0
    %s143 = smul.u32 %s142, 8
    %v144 = vlaneseq
    %v145 = vshrl.u32 %v144, 7
    %v146 = vstv %s143
    %v147 = vadd.s32 %v146, %v145
    %vm148 = vcmp.lt.s32.totalorder %v147, 8
    %v149 = vsel %vm148, %v137, 0.0
    %vm150 = vcmask 7168
    %v151 = vsel %vm150, %v149, 0.0
    %152 = vadd.xlane.f32.xlu0 %v151
    %v153 = vpop.xlane.xlu0 %152
    %v154 = vrot.slane %v153, 4
    %v155 = vadd.f32 %v153, %v154
    %v156 = vrot.slane %v155, 2
    %v157 = vadd.f32 %v155, %v156
    %v158 = vrot.slane %v157, 1
    %v159 = vadd.f32 %v157, %v158
    %s160 = vtos %v159
    %v161 = vsel %vm148, %v141, 0.0
    %v162 = vsel %vm150, %v161, 0.0
    %163 = vadd.xlane.f32.xlu0 %v162
    %v164 = vpop.xlane.xlu0 %163
    %v165 = vrot.slane %v164, 4
    %v166 = vadd.f32 %v164, %v165
    %v167 = vrot.slane %v166, 2
    %v168 = vadd.f32 %v166, %v167
    %v169 = vrot.slane %v168, 1
    %v170 = vadd.f32 %v168, %v169
    %s171 = vtos %v170
    %v172 = vld [vmem:[#allocation2] sm:$0x1]
    %vm173 = vcmp.eq.s32.totalorder %v116, 0
    %v174 = vstv %s160
    %v175 = vstv %s171
    %v176 = vsel %vm173, %v174, %v175
    %v177 = vadd.f32 %v172, %v176
    %vm178 = vcmask 8192
    %179 = vst.msk [vmem:[#allocation2] sm:$0x1] %vm178, %v177
    // Predicated region
    $region18: #{tpu_custom_call.1} parent=1 // pred_check
      %p180 = pneg %p96
    $region19: #{tpu_custom_call.1} parent=1 // pred_check_branch
      %182 = sbr.rel (%p180) target = $region21
    $region20: #{tpu_custom_call.1} parent=1 // pred_region
      %v183 = vld [vmem:[#allocation2] sm:$0x1]
      %v184 = vmul.f32 %v183, 0.125
      %185 = vst.msk [vmem:[#allocation2] sm:$0x1] %vm178, %v184
    $region21: #{tpu_custom_call.1} parent=1 // pred_fallthru
      _
    // Predicated region
    $region22: #{tpu_custom_call.1} parent=1 // pred_check
      _
    $region23: #{tpu_custom_call.1} parent=1 // pred_check_branch
      %187 = sbr.rel (0) target = $region25
    $region24: #{tpu_custom_call.1} parent=1 // pred_region
      %s189 = ssub.s32 16, 16
      %190 = vsyncadd [#allocation3], %s189
      %s192 = sshll.u32 [#allocation2], 4
      %s193 = int_to_ptr.vmem [resolvable:$true] %s192
      %195 = dma.vmem_to_hbm [thread:$0]  %s193, 16, %s3, [#allocation3]
    $region25: #{tpu_custom_call.1} parent=1 // pred_fallthru
      _
    // Predicated region
    $region26: #{tpu_custom_call.1} parent=1 // pred_check
      _
    $region27: #{tpu_custom_call.1} parent=1 // pred_check_branch
      %197 = sbr.rel (0) target = $region29
    $region28: #{tpu_custom_call.1} parent=1 // pred_region
      %198 = dma.done [#allocation3], 16
    $region29: #{tpu_custom_call.1} parent=1 // pred_fallthru
      _
    %199 = vsyncpa [#allocation3], 1

</llo_original>
